<compile_context>
chip_gen: v7x
topology: tpu7x:2x2x1
jax: 0.10.0
libtpu: 0.0.40
codegen_flags: <defaults>
</compile_context>

<pallas_src>
import numpy as np
import jax
import jax.numpy as jnp
from jax.experimental import pallas as pl
from jax.experimental.pallas import tpu as pltpu


# ----------------------------------------------------------------------------
# Fused Pallas kernel: one (batch element, channel tile) per grid step.
# ----------------------------------------------------------------------------
def ppm_kernel(x_ref, pT_ref, w_ref, bias_ref, mask_ref, uT_ref, o_ref, acc_ref):
    # x_ref   : (1, Ct, HW)   bf16 input channel tile (one batch element)
    # pT_ref  : (HW, B2PAD)   bf16 merged pooling matrix P_all^T (zero-pad cols)
    # w_ref   : (nR, Ct)      bf16 stacked 1x1 conv weights, BN scale folded
    # bias_ref: (nR, 1)       f32 folded BN bias (broadcast in-kernel)
    # mask_ref: (nR, B2PAD)   f32 block-diagonal bin mask
    # uT_ref  : (B2PAD, HW)   bf16 merged upsample matrix U_all^T (zero-pad rows)
    # o_ref   : (1, nR, HW)   output slab for this batch element
    # acc_ref : (nR, B2PAD)   f32 conv accumulator across channel tiles
    k = pl.program_id(1)

    @pl.when(k == 0)
    def _init():
        acc_ref[...] = jnp.zeros_like(acc_ref)

    # pooled features for every bin at once: (Ct, B2PAD), f32 accumulation
    pooled = jnp.dot(x_ref[0], pT_ref[...], preferred_element_type=jnp.float32)
    # stacked 1x1 conv (BN scale folded); accumulate over channel tiles
    acc_ref[...] += jnp.dot(w_ref[...], pooled.astype(jnp.bfloat16),
                            preferred_element_type=jnp.float32)

    @pl.when(k == pl.num_programs(1) - 1)
    def _finalize():
        # bias broadcast + ReLU on the VPU; block-diagonal mask kills the
        # cross-bin garbage of the stacked conv and the B2 padding columns.
        z = jnp.maximum(acc_ref[...] + bias_ref[...], 0.0) * mask_ref[...]
        out = jnp.dot(z.astype(jnp.bfloat16), uT_ref[...],
                      preferred_element_type=jnp.float32)
        o_ref[0] = out.astype(o_ref.dtype)


def ppm_forward(x, pT, uT, w, bias, mask, *, c_tile=None):
    """Full PPM forward: all bins fused, one pallas_call, grid = (N, C-tiles)."""
    N, C, H, W = x.shape
    HW, B2PAD = pT.shape
    nR = w.shape[0]
    assert HW == H * W

    if c_tile is None:
        c_tile = min(C, 512)           # v7x-friendly channel tile at real sizes
    assert C % c_tile == 0, "C must be a multiple of the channel tile"
    kc = C // c_tile

    # lane-dense spatial layout; bf16 matmul operands (f32 accumulation in-kernel)
    x2 = x.reshape(N, C, HW).astype(jnp.bfloat16)

    out = pl.pallas_call(
        ppm_kernel,
        out_shape=jax.ShapeDtypeStruct((N, nR, HW), x.dtype),
        grid_spec=pltpu.PrefetchScalarGridSpec(
            num_scalar_prefetch=0,
            grid=(N, kc),              # channel-reduction axis LAST ("arbitrary")
            in_specs=[
                # x tile: varies with (batch, C-tile) only -> read once per batch
                pl.BlockSpec((1, c_tile, HW), lambda n, k: (n, k, 0)),
                pl.BlockSpec((HW, B2PAD),     lambda n, k: (0, 0)),   # P_all^T
                pl.BlockSpec((nR, c_tile),    lambda n, k: (0, k)),   # stacked W
                pl.BlockSpec((nR, 1),         lambda n, k: (0, 0)),   # folded bias
                pl.BlockSpec((nR, B2PAD),     lambda n, k: (0, 0)),   # bin mask
                pl.BlockSpec((B2PAD, HW),     lambda n, k: (0, 0)),   # U_all^T
            ],
            out_specs=pl.BlockSpec((1, nR, HW), lambda n, k: (n, 0, 0)),
            scratch_shapes=[pltpu.VMEM((nR, B2PAD), jnp.float32)],
        ),
        compiler_params=pltpu.CompilerParams(
            dimension_semantics=("parallel", "arbitrary")),
    )(x2, pT, w, bias, mask, uT)

    return out.reshape(N, nR, H, W)


# ----------------------------------------------------------------------------
# Glue: separable matrices for AdaptiveAvgPool2d / bilinear(align_corners=True)
# ----------------------------------------------------------------------------
def adaptive_pool_matrix(in_size, out_size):
    """P[i, h] s.t. (P @ v) reproduces torch.nn.AdaptiveAvgPool1d semantics."""
    P = np.zeros((out_size, in_size), dtype=np.float32)
    for i in range(out_size):
        start = (i * in_size) // out_size
        end = -(-((i + 1) * in_size) // out_size)  # ceil division
        P[i, start:end] = 1.0 / float(end - start)
    return P


def bilinear_matrix(out_size, in_size):
    """U[o, i] s.t. (U @ v) == F.interpolate(v, mode='linear', align_corners=True)."""
    U = np.zeros((out_size, in_size), dtype=np.float32)
    if in_size == 1:
        U[:, 0] = 1.0
        return U
    scale = (in_size - 1) / (out_size - 1)
    for o in range(out_size):
        src = o * scale
        i0 = min(int(np.floor(src)), in_size - 2)
        frac = src - i0
        U[o, i0] += 1.0 - frac
        U[o, i0 + 1] += frac
    return U


def build_ppm_params(bins, H, W, conv_ws, gammas, betas, means, variances,
                     eps=1e-5, b2_pad=128):
    """Build merged (bin-concatenated) zero-padded Kronecker matrices, stacked
    folded conv/BN params and the block-diagonal mask for the fused kernel,
    plus per-bin separable params for the pure-JAX reference."""
    HW = H * W
    n_bins = len(bins)
    R, C = np.asarray(conv_ws[0]).shape
    nR = n_bins * R
    b2s = [b * b for b in bins]
    offs = np.concatenate([[0], np.cumsum(b2s)])
    assert offs[-1] <= b2_pad

    pT_all = np.zeros((HW, b2_pad), dtype=np.float32)     # padded cols -> pooled 0
    uT_all = np.zeros((b2_pad, HW), dtype=np.float32)     # padded rows -> no contrib
    w_all = np.zeros((nR, C), dtype=np.float32)
    bias_all = np.zeros((nR, 1), dtype=np.float32)
    mask = np.zeros((nR, b2_pad), dtype=np.float32)
    ref_params = []

    for j, b in enumerate(bins):
        off = int(offs[j])
        ph = adaptive_pool_matrix(H, b)           # (b, H)
        pw = adaptive_pool_matrix(W, b)           # (b, W)
        uh = bilinear_matrix(H, b)                # (H, b)
        uw = bilinear_matrix(W, b)                # (W, b)

        P = np.kron(ph, pw)                       # (b*b, H*W)
        U = np.kron(uh, uw)                       # (H*W, b*b)
        pT_all[:, off:off + b * b] = P.T
        uT_all[off:off + b * b, :] = U.T

        wc = np.asarray(conv_ws[j], dtype=np.float32)                     # (R, C)
        scale = np.asarray(gammas[j]) / np.sqrt(np.asarray(variances[j]) + eps)
        bias = np.asarray(betas[j]) - np.asarray(means[j]) * scale
        w_all[j * R:(j + 1) * R] = scale[:, None] * wc     # fold BN scale into W
        bias_all[j * R:(j + 1) * R, 0] = bias
        mask[j * R:(j + 1) * R, off:off + b * b] = 1.0     # bin block-diagonal

        ref_params.append((jnp.asarray(ph), jnp.asarray(pw.T),
                           jnp.asarray(uh), jnp.asarray(uw.T),
                           jnp.asarray(wc), jnp.asarray(scale.astype(np.float32)),
                           jnp.asarray(bias.astype(np.float32))))

    # bf16 storage for matmul operands (halves HBM traffic; f32 accumulation
    # happens on the MXU), f32 for the VPU-side bias / mask.
    return (jnp.asarray(pT_all, dtype=jnp.bfloat16),
            jnp.asarray(uT_all, dtype=jnp.bfloat16),
            jnp.asarray(w_all, dtype=jnp.bfloat16),
            jnp.asarray(bias_all),
            jnp.asarray(mask),
            ref_params)


# ----------------------------------------------------------------------------
# Pure-JAX reference (same math, f32 HIGHEST precision) for correctness check.
# ----------------------------------------------------------------------------
def ppm_reference(x, ref_params):
    hp = jax.lax.Precision.HIGHEST
    outs = []
    for (ph, pwT, uh, uwT, wc, scale, bias) in ref_params:
        pooled = jnp.einsum('ih,nchw,wj->ncij', ph, x, pwT, precision=hp)
        y = jnp.einsum('rc,ncij->nrij', wc, pooled, precision=hp)
        y = jnp.maximum(y * scale[None, :, None, None]
                        + bias[None, :, None, None], 0.0)
        outs.append(jnp.einsum('Hi,nrij,jW->nrHW', uh, y, uwT, precision=hp))
    return jnp.concatenate(outs, axis=1)


# ----------------------------------------------------------------------------
if __name__ == "__main__":
    N, C, H, W = 2, 4, 16, 16          # in_dim = 4
    R = 8                              # reduction_dim = 8
    bins = (1, 2, 3, 6)                # PSPNet-style pyramid bins
    eps = 1e-5                         # PyTorch BatchNorm2d default

    key = jax.random.PRNGKey(0)
    kx, kp = jax.random.split(key)
    x = jax.random.normal(kx, (N, C, H, W), dtype=jnp.float32)

    # Deterministic synthetic parameters per bin branch.
    conv_ws, gammas, betas, means, variances = [], [], [], [], []
    for i, b in enumerate(bins):
        kw, kg, kb, km, kv = jax.random.split(jax.random.fold_in(kp, i), 5)
        conv_ws.append(np.asarray(0.1 * jax.random.normal(kw, (R, C)),
                                  dtype=np.float32))
        gammas.append(np.asarray(1.0 + 0.1 * jax.random.normal(kg, (R,)),
                                 dtype=np.float32))
        betas.append(np.asarray(0.1 * jax.random.normal(kb, (R,)),
                                dtype=np.float32))
        means.append(np.asarray(0.1 * jax.random.normal(km, (R,)),
                                dtype=np.float32))
        variances.append(np.asarray(0.5 + jnp.abs(jax.random.normal(kv, (R,))),
                                    dtype=np.float32))

    pT_all, uT_all, w_all, bias_all, mask, ref_params = build_ppm_params(
        bins, H, W, conv_ws, gammas, betas, means, variances, eps)

    out = ppm_forward(x, pT_all, uT_all, w_all, bias_all, mask)
    out = jax.block_until_ready(out)

    assert out.shape == (N, R * len(bins), H, W), out.shape

    ref = jax.block_until_ready(ppm_reference(x, ref_params))
    # Intentionally loose tolerance: kernel matmul operands are bf16 (with f32
    # MXU accumulation), while the reference runs in f32 HIGHEST precision.
    np.testing.assert_allclose(np.asarray(out), np.asarray(ref),
                               rtol=2e-2, atol=2e-2)

    print("KERNEL_OK")
</pallas_src>

<mosaic_0001>
module attributes {stable_mosaic.version = 11 : i64} {
  func.func @ppm_kernel(%arg0: i32, %arg1: i32, %arg2: memref<1x4x256xbf16, #tpu.memory_space<vmem>>, %arg3: memref<256x128xbf16, #tpu.memory_space<vmem>>, %arg4: memref<32x4xbf16, #tpu.memory_space<vmem>>, %arg5: memref<32x1xf32, #tpu.memory_space<vmem>>, %arg6: memref<32x128xf32, #tpu.memory_space<vmem>>, %arg7: memref<128x256xbf16, #tpu.memory_space<vmem>>, %arg8: memref<1x32x256xf32, #tpu.memory_space<vmem>>, %arg9: memref<32x128xf32, #tpu.memory_space<vmem>>) attributes {dimension_semantics = [#tpu.dimension_semantics<parallel>, #tpu.dimension_semantics<arbitrary>], iteration_bounds = array<i64: 2, 1>, scalar_prefetch = 0 : i64, scratch_operands = 1 : i64, tpu.core_type = #tpu.core_type<tc>, window_params = [{transform_indices = @transform_0, window_bounds = array<i64: 1, 4, 256>}, {pipeline_mode = #tpu.pipeline_mode<synchronous>, transform_indices = @transform_1, window_bounds = array<i64: 256, 128>}, {transform_indices = @transform_2, window_bounds = array<i64: 32, 4>}, {pipeline_mode = #tpu.pipeline_mode<synchronous>, transform_indices = @transform_3, window_bounds = array<i64: 32, 1>}, {pipeline_mode = #tpu.pipeline_mode<synchronous>, transform_indices = @transform_4, window_bounds = array<i64: 32, 128>}, {pipeline_mode = #tpu.pipeline_mode<synchronous>, transform_indices = @transform_5, window_bounds = array<i64: 128, 256>}, {transform_indices = @transform_6, window_bounds = array<i64: 1, 32, 256>}]} {
    %c0_i32 = arith.constant 0 : i32
    %0 = arith.cmpi eq, %arg1, %c0_i32 : i32
    %1 = arith.extui %0 : i1 to i32
    %c0_i32_0 = arith.constant 0 : i32
    %2 = arith.cmpi ne, %1, %c0_i32_0 : i32
    scf.if %2 {
      %cst_14 = arith.constant 0.000000e+00 : f32
      %16 = vector.broadcast %cst_14 : f32 to vector<32x128xf32>
      %c0_15 = arith.constant 0 : index
      %c0_16 = arith.constant 0 : index
      %17 = vector.load %arg9[%c0_15, %c0_16] : memref<32x128xf32, #tpu.memory_space<vmem>>, vector<32x128xf32>
      tpu.vector_store %arg9[%c0_15, %c0_16], %16 {strides = array<i32>} : memref<32x128xf32, #tpu.memory_space<vmem>>, vector<32x128xf32>,
    } else {
    }
    %c0 = arith.constant 0 : index
    %c0_1 = arith.constant 0 : index
    %c0_2 = arith.constant 0 : index
    %3 = vector.load %arg2[%c0, %c0_1, %c0_2] : memref<1x4x256xbf16, #tpu.memory_space<vmem>>, vector<1x4x256xbf16>
    %4 = vector.shape_cast %3 : vector<1x4x256xbf16> to vector<4x256xbf16>
    %c0_3 = arith.constant 0 : index
    %c0_4 = arith.constant 0 : index
    %5 = vector.load %arg3[%c0_3, %c0_4] : memref<256x128xbf16, #tpu.memory_space<vmem>>, vector<256x128xbf16>
    %cst = arith.constant dense<0.000000e+00> : vector<4x128xf32>
    %6 = tpu.matmul %4, %5, %cst {dimension_numbers = #tpu.dot_dimension_numbers<[1], [0], [0], [1], [0, 0, 1, 1], [], []>} : vector<4x256xbf16>, vector<256x128xbf16>, vector<4x128xf32> -> vector<4x128xf32>
    %c0_5 = arith.constant 0 : index
    %c0_6 = arith.constant 0 : index
    %7 = vector.load %arg9[%c0_5, %c0_6] : memref<32x128xf32, #tpu.memory_space<vmem>>, vector<32x128xf32>
    %c0_7 = arith.constant 0 : index
    %c0_8 = arith.constant 0 : index
    %8 = vector.load %arg4[%c0_7, %c0_8] : memref<32x4xbf16, #tpu.memory_space<vmem>>, vector<32x4xbf16>
    %9 = arith.truncf %6 : vector<4x128xf32> to vector<4x128xbf16>
    %cst_9 = arith.constant dense<0.000000e+00> : vector<32x128xf32>
    %10 = tpu.matmul %8, %9, %cst_9 {dimension_numbers = #tpu.dot_dimension_numbers<[1], [0], [0], [1], [0, 0, 1, 1], [], []>} : vector<32x4xbf16>, vector<4x128xbf16>, vector<32x128xf32> -> vector<32x128xf32>
    %11 = arith.addf %7, %10 : vector<32x128xf32>
    %c0_10 = arith.constant 0 : index
    %c0_11 = arith.constant 0 : index
    %12 = vector.load %arg9[%c0_10, %c0_11] : memref<32x128xf32, #tpu.memory_space<vmem>>, vector<32x128xf32>
    tpu.vector_store %arg9[%c0_10, %c0_11], %11 {strides = array<i32>} : memref<32x128xf32, #tpu.memory_space<vmem>>, vector<32x128xf32>,
    %c0_i32_12 = arith.constant 0 : i32
    %13 = arith.cmpi eq, %arg1, %c0_i32_12 : i32
    %14 = arith.extui %13 : i1 to i32
    %c0_i32_13 = arith.constant 0 : i32
    %15 = arith.cmpi ne, %14, %c0_i32_13 : i32
    scf.if %15 {
      %c0_14 = arith.constant 0 : index
      %c0_15 = arith.constant 0 : index
      %16 = vector.load %arg9[%c0_14, %c0_15] : memref<32x128xf32, #tpu.memory_space<vmem>>, vector<32x128xf32>
      %c0_16 = arith.constant 0 : index
      %c0_17 = arith.constant 0 : index
      %17 = vector.load %arg5[%c0_16, %c0_17] : memref<32x1xf32, #tpu.memory_space<vmem>>, vector<32x1xf32>
      %18 = vector.broadcast %17 : vector<32x1xf32> to vector<32x128xf32>
      %19 = arith.addf %16, %18 : vector<32x128xf32>
      %cst_18 = arith.constant 0.000000e+00 : f32
      %20 = vector.broadcast %cst_18 : f32 to vector<32x128xf32>
      %21 = arith.maximumf %19, %20 : vector<32x128xf32>
      %c0_19 = arith.constant 0 : index
      %c0_20 = arith.constant 0 : index
      %22 = vector.load %arg6[%c0_19, %c0_20] : memref<32x128xf32, #tpu.memory_space<vmem>>, vector<32x128xf32>
      %23 = arith.mulf %21, %22 : vector<32x128xf32>
      %24 = arith.truncf %23 : vector<32x128xf32> to vector<32x128xbf16>
      %c0_21 = arith.constant 0 : index
      %c0_22 = arith.constant 0 : index
      %25 = vector.load %arg7[%c0_21, %c0_22] : memref<128x256xbf16, #tpu.memory_space<vmem>>, vector<128x256xbf16>
      %cst_23 = arith.constant dense<0.000000e+00> : vector<32x256xf32>
      %26 = tpu.matmul %24, %25, %cst_23 {dimension_numbers = #tpu.dot_dimension_numbers<[1], [0], [0], [1], [0, 0, 1, 1], [], []>} : vector<32x128xbf16>, vector<128x256xbf16>, vector<32x256xf32> -> vector<32x256xf32>
      %c0_24 = arith.constant 0 : index
      %c0_25 = arith.constant 0 : index
      %c0_26 = arith.constant 0 : index
      %27 = vector.load %arg8[%c0_24, %c0_25, %c0_26] : memref<1x32x256xf32, #tpu.memory_space<vmem>>, vector<1x32x256xf32>
      %28 = vector.shape_cast %27 : vector<1x32x256xf32> to vector<32x256xf32>
      %29 = vector.shape_cast %26 : vector<32x256xf32> to vector<1x32x256xf32>
      tpu.vector_store %arg8[%c0_24, %c0_25, %c0_26], %29 {strides = array<i32>} : memref<1x32x256xf32, #tpu.memory_space<vmem>>, vector<1x32x256xf32>,
    } else {
    }
    return
  }
  func.func @transform_0(%arg0: i32, %arg1: i32) -> (i32, i32, i32) {
    %c0_i32 = arith.constant 0 : i32
    %c0_i32_0 = arith.constant 0 : i32
    return %arg0, %arg1, %c0_i32 : i32, i32, i32
  }
  func.func @transform_1(%arg0: i32, %arg1: i32) -> (i32, i32) {
    %c0_i32 = arith.constant 0 : i32
    %c0_i32_0 = arith.constant 0 : i32
    %c0_i32_1 = arith.constant 0 : i32
    return %c0_i32, %c0_i32_0 : i32, i32
  }
  func.func @transform_2(%arg0: i32, %arg1: i32) -> (i32, i32) {
    %c0_i32 = arith.constant 0 : i32
    %c0_i32_0 = arith.constant 0 : i32
    return %c0_i32, %arg1 : i32, i32
  }
  func.func @transform_3(%arg0: i32, %arg1: i32) -> (i32, i32) {
    %c0_i32 = arith.constant 0 : i32
    %c0_i32_0 = arith.constant 0 : i32
    %c0_i32_1 = arith.constant 0 : i32
    return %c0_i32, %c0_i32_0 : i32, i32
  }
  func.func @transform_4(%arg0: i32, %arg1: i32) -> (i32, i32) {
    %c0_i32 = arith.constant 0 : i32
    %c0_i32_0 = arith.constant 0 : i32
    %c0_i32_1 = arith.constant 0 : i32
    return %c0_i32, %c0_i32_0 : i32, i32
  }
  func.func @transform_5(%arg0: i32, %arg1: i32) -> (i32, i32) {
    %c0_i32 = arith.constant 0 : i32
    %c0_i32_0 = arith.constant 0 : i32
    %c0_i32_1 = arith.constant 0 : i32
    return %c0_i32, %c0_i32_0 : i32, i32
  }
  func.func @transform_6(%arg0: i32, %arg1: i32) -> (i32, i32, i32) {
    %c0_i32 = arith.constant 0 : i32
    %c0_i32_0 = arith.constant 0 : i32
    %c0_i32_1 = arith.constant 0 : i32
    return %arg0, %c0_i32, %c0_i32_0 : i32, i32, i32
  }
}

</mosaic_0001>

<llo_original>
// kernel: tpu_custom_call.1
$region0: #{tpu_custom_call.1}
  #allocation0 [shape = 'u32[]', space=smem, size = 0x4, offset = 0x4, fixed_abs, tag = 'smem constant byte address 0x4 - core index']
  #allocation1 [shape = 'u32[144,128]{1,0:T(1,128)}', space=vmem, size = 0x12000, scoped, tag = 'internal scratch']
  #allocation2 [shape = 'f32[32,128]{1,0:T(8,128)}', space=vmem, size = 0x4000, scoped, tag = 'scratch operand']
  %s0 = inlined_call_operand.vmem [shape: bf16[2,4,256], index: 0, kind: input, shape index: {}]
  %s1 = inlined_call_operand.hbm [shape: bf16[256,128], index: 1, kind: input, shape index: {}]
  %s2 = inlined_call_operand.vmem [shape: bf16[32,4], index: 2, kind: input, shape index: {}]
  %s3 = inlined_call_operand.vmem [shape: f32[32,1], index: 3, kind: input, shape index: {}]
  %s4 = inlined_call_operand.vmem [shape: f32[32,128], index: 4, kind: input, shape index: {}]
  %s5 = inlined_call_operand.hbm [shape: bf16[128,256], index: 5, kind: input, shape index: {}]
  %s6 = inlined_call_operand.hbm [shape: f32[2,32,256], index: 6, kind: output, shape index: {}]
  %s7 = sld [smem:[#allocation0]]
  $region73: #{tpu_custom_call.1} parent=0
    _
  %s9 = ssub.s32 1, %s7
  %s10 = scalar_select 0, %s9, %s7
  $region1: #{tpu_custom_call.1} parent=0
    #allocation3 [shape = 'u8[65536]{0}', space=vmem, size = 0x10000, scoped, tag = 'input window, operand 1, single buffered']
    #allocation4 [shape = 's32[2]{0}', space=sflag, size = 0x8, scoped, tag = 'scoped memory for tpu_custom_call.1']
    #allocation5 [shape = 's32[2]{0}', space=sflag, size = 0x8, scoped, tag = 'scoped memory for tpu_custom_call.1']
    #allocation6 [shape = 'u8[65536]{0}', space=vmem, size = 0x10000, scoped, tag = 'input window, operand 5, single buffered']
    #allocation7 [shape = 's32[1]{0}', space=sflag, size = 0x4, scoped, tag = 'scoped memory for tpu_custom_call.1']
    #allocation8 [shape = 'u8[65536]{0}', space=vmem, size = 0x10000, scoped, tag = 'output window, operand 0']
    %11 = vsyncpa [#allocation4], 0
    %12 = vsyncpa [#allocation7], 0
    %13 = vsyncpa [#allocation5], 0
    %s14 = scalar_lea.sflag [#allocation5], 1
    %15 = vsyncpa %s14, 0
    loop: start=0, step=1, limit=4
    $region2: #{tpu_custom_call.1} parent=1 // loop_pre_header
      _
    $region3: #{tpu_custom_call.1} parent=1 // loop_header
      %s17 = sphi 0, %s21
      %p18 = scmp.ge.s32.totalorder %s17, 4
      %s24 = sphi 0, %s36
      %s25 = sphi 0, %s32
      %s26 = sphi 0, %s24
      %s27 = sphi 0, %s25
      %s28 = sphi 0, %s26
      %s29 = sphi 0, %s27
      %s41 = sphi 0, %s43
      %s44 = sphi 0, %s41
      %s45 = sphi 0, %s44
      %s61 = sphi 0, %s45
      %s65 = sphi 0, %s65
      %s67 = sphi 0, %s65
      %s68 = sphi 0, %s67
      %s82 = sphi 0, %s68
      %s88 = sphi 0, %s90
      %s91 = sphi 0, %s88
      %s92 = sphi 0, %s91
      %s108 = sphi 0, %s92
      %s112 = sphi 0, %s112
      %s114 = sphi 0, %s112
      %s115 = sphi 0, %s114
      %s129 = sphi 0, %s115
      %s133 = sphi 0, %s133
      %s135 = sphi 0, %s133
      %s136 = sphi 0, %s135
      %s150 = sphi 0, %s136
      %s154 = sphi 0, %s154
      %s156 = sphi 0, %s154
      %s157 = sphi 0, %s156
      %s171 = sphi 0, %s157
      %s177 = sphi 0, %s179
      %s180 = sphi 0, %s177
      %s181 = sphi 0, %s180
      %s197 = sphi 0, %s181
    $region4: #{tpu_custom_call.1} parent=1 // loop_header_branch
      %20 = sbr.rel (%p18) target = $region8
    $region5: #{tpu_custom_call.1} parent=1 // loop_body
      %s22 = ssub.s32 %s17, 1
      %s23 = ssub.s32 %s17, 2
      %s30 = sadd.s32 1, %s25
      %p31 = scmp.ge.s32.totalorder %s30, 1
      %s32 = scalar_select %p31, 0, %s30
      %s33 = sadd.s32 1, %s24
      %s34 = scalar_select %p31, %s33, %s24
      %p35 = scmp.ge.s32.totalorder %s34, 2
      %s36 = scalar_select %p35, 0, %s34
      %s37 = ssub.s32 %s24, %s36
      %s38 = ssub.s32 %s25, %s32
      %s39 = sor.u32 %s37, %s38
      %p40 = scmp.eq.s32.totalorder %s39, 0
      %s42 = sadd.s32 %s41, 1
      %s43 = scalar_select %p40, %s41, %s42
      %p46 = pneg %p40
      %p47 = scmp.eq.s32.totalorder %s17, 1
      %p48 = por %p46, %p47
      %p49 = scmp.ne.s32.totalorder %s41, %s44
      %p50 = scmp.eq.s32.totalorder %s17, 0
      %p51 = por %p49, %p50
      %p52 = scmp.ne.s32.totalorder %s41, %s44
      %p53 = scmp.eq.s32.totalorder %s22, 1
      %p54 = por %p52, %p53
      %p55 = scmp.ne.s32.totalorder %s44, %s45
      %p56 = scmp.eq.s32.totalorder %s22, 0
      %p57 = por %p55, %p56
      %p58 = scmp.ne.s32.totalorder %s44, %s45
      %p59 = scmp.eq.s32.totalorder %s23, 1
      %p60 = por %p58, %p59
      %p62 = scmp.ne.s32.totalorder %s45, %s61
      %p63 = scmp.eq.s32.totalorder %s23, 0
      %p64 = por %p62, %p63
      %s66 = sadd.s32 %s65, 1
      %p69 = scmp.eq.s32.totalorder %s17, 1
      %p70 = scmp.ne.s32.totalorder %s65, %s67
      %p71 = scmp.eq.s32.totalorder %s17, 0
      %p72 = por %p70, %p71
      %p73 = scmp.ne.s32.totalorder %s65, %s67
      %p74 = scmp.eq.s32.totalorder %s22, 1
      %p75 = por %p73, %p74
      %p76 = scmp.ne.s32.totalorder %s67, %s68
      %p77 = scmp.eq.s32.totalorder %s22, 0
      %p78 = por %p76, %p77
      %p79 = scmp.ne.s32.totalorder %s67, %s68
      %p80 = scmp.eq.s32.totalorder %s23, 1
      %p81 = por %p79, %p80
      %p83 = scmp.ne.s32.totalorder %s68, %s82
      %p84 = scmp.eq.s32.totalorder %s23, 0
      %p85 = por %p83, %p84
      %s86 = ssub.s32 %s25, %s32
      %p87 = scmp.eq.s32.totalorder %s86, 0
      %s89 = sadd.s32 %s88, 1
      %s90 = scalar_select %p87, %s88, %s89
      %p93 = pneg %p87
      %p94 = scmp.eq.s32.totalorder %s17, 1
      %p95 = por %p93, %p94
      %p96 = scmp.ne.s32.totalorder %s88, %s91
      %p97 = scmp.eq.s32.totalorder %s17, 0
      %p98 = por %p96, %p97
      %p99 = scmp.ne.s32.totalorder %s88, %s91
      %p100 = scmp.eq.s32.totalorder %s22, 1
      %p101 = por %p99, %p100
      %p102 = scmp.ne.s32.totalorder %s91, %s92
      %p103 = scmp.eq.s32.totalorder %s22, 0
      %p104 = por %p102, %p103
      %p105 = scmp.ne.s32.totalorder %s91, %s92
      %p106 = scmp.eq.s32.totalorder %s23, 1
      %p107 = por %p105, %p106
      %p109 = scmp.ne.s32.totalorder %s92, %s108
      %p110 = scmp.eq.s32.totalorder %s23, 0
      %p111 = por %p109, %p110
      %s113 = sadd.s32 %s112, 1
      %p116 = scmp.eq.s32.totalorder %s17, 1
      %p117 = scmp.ne.s32.totalorder %s112, %s114
      %p118 = scmp.eq.s32.totalorder %s17, 0
      %p119 = por %p117, %p118
      %p120 = scmp.ne.s32.totalorder %s112, %s114
      %p121 = scmp.eq.s32.totalorder %s22, 1
      %p122 = por %p120, %p121
      %p123 = scmp.ne.s32.totalorder %s114, %s115
      %p124 = scmp.eq.s32.totalorder %s22, 0
      %p125 = por %p123, %p124
      %p126 = scmp.ne.s32.totalorder %s114, %s115
      %p127 = scmp.eq.s32.totalorder %s23, 1
      %p128 = por %p126, %p127
      %p130 = scmp.ne.s32.totalorder %s115, %s129
      %p131 = scmp.eq.s32.totalorder %s23, 0
      %p132 = por %p130, %p131
      %s134 = sadd.s32 %s133, 1
      %p137 = scmp.eq.s32.totalorder %s17, 1
      %p138 = scmp.ne.s32.totalorder %s133, %s135
      %p139 = scmp.eq.s32.totalorder %s17, 0
      %p140 = por %p138, %p139
      %p141 = scmp.ne.s32.totalorder %s133, %s135
      %p142 = scmp.eq.s32.totalorder %s22, 1
      %p143 = por %p141, %p142
      %p144 = scmp.ne.s32.totalorder %s135, %s136
      %p145 = scmp.eq.s32.totalorder %s22, 0
      %p146 = por %p144, %p145
      %p147 = scmp.ne.s32.totalorder %s135, %s136
      %p148 = scmp.eq.s32.totalorder %s23, 1
      %p149 = por %p147, %p148
      %p151 = scmp.ne.s32.totalorder %s136, %s150
      %p152 = scmp.eq.s32.totalorder %s23, 0
      %p153 = por %p151, %p152
      %s155 = sadd.s32 %s154, 1
      %p158 = scmp.eq.s32.totalorder %s17, 1
      %p159 = scmp.ne.s32.totalorder %s154, %s156
      %p160 = scmp.eq.s32.totalorder %s17, 0
      %p161 = por %p159, %p160
      %p162 = scmp.ne.s32.totalorder %s154, %s156
      %p163 = scmp.eq.s32.totalorder %s22, 1
      %p164 = por %p162, %p163
      %p165 = scmp.ne.s32.totalorder %s156, %s157
      %p166 = scmp.eq.s32.totalorder %s22, 0
      %p167 = por %p165, %p166
      %p168 = scmp.ne.s32.totalorder %s156, %s157
      %p169 = scmp.eq.s32.totalorder %s23, 1
      %p170 = por %p168, %p169
      %p172 = scmp.ne.s32.totalorder %s157, %s171
      %p173 = scmp.eq.s32.totalorder %s23, 0
      %p174 = por %p172, %p173
      %s175 = ssub.s32 %s24, %s36
      %p176 = scmp.eq.s32.totalorder %s175, 0
      %s178 = sadd.s32 %s177, 1
      %s179 = scalar_select %p176, %s177, %s178
      %p182 = pneg %p176
      %p183 = scmp.eq.s32.totalorder %s17, 1
      %p184 = por %p182, %p183
      %p185 = scmp.ne.s32.totalorder %s177, %s180
      %p186 = scmp.eq.s32.totalorder %s17, 0
      %p187 = por %p185, %p186
      %p188 = scmp.ne.s32.totalorder %s177, %s180
      %p189 = scmp.eq.s32.totalorder %s22, 1
      %p190 = por %p188, %p189
      %p191 = scmp.ne.s32.totalorder %s180, %s181
      %p192 = scmp.eq.s32.totalorder %s22, 0
      %p193 = por %p191, %p192
      %p194 = scmp.ne.s32.totalorder %s180, %s181
      %p195 = scmp.eq.s32.totalorder %s23, 1
      %p196 = por %p194, %p195
      %p198 = scmp.ne.s32.totalorder %s181, %s197
      %p199 = scmp.eq.s32.totalorder %s23, 0
      %p200 = por %p198, %p199
      %p201 = scmp.le.s32.totalorder 1, %s17
      %p202 = scmp.lt.s32.totalorder %s17, 3
      %p203 = pnand %p201, %p202
      %p204 = pneg %p203
      // Predicated region
      $region9: #{tpu_custom_call.1} parent=5 // pred_check
        _
      $region10: #{tpu_custom_call.1} parent=5 // pred_check_branch
        %206 = sbr.rel (%p203) target = $region12
      $region11: #{tpu_custom_call.1} parent=5 // pred_region
        %s207 = ssub.s32 %s17, 1
        // Predicated region
        $region13: #{tpu_custom_call.1} parent=11 // pred_check
          %p208 = pneg %p78
        $region14: #{tpu_custom_call.1} parent=11 // pred_check_branch
          %210 = sbr.rel (%p208) target = $region16
        $region15: #{tpu_custom_call.1} parent=11 // pred_region
          %s212 = ssub.s32 2048, 2048
          %213 = vsyncadd [#allocation4], %s212
          %s214 = sshll.u32 [#allocation3], 4
          %s215 = int_to_ptr.vmem [resolvable:$true] %s214
          %220 = dma.hbm_to_vmem [thread:$0]  %s1, 2048, %s215, [#allocation4], 64, 64, 4
        $region16: #{tpu_custom_call.1} parent=11 // pred_fallthru
          _
        // Predicated region
        $region17: #{tpu_custom_call.1} parent=11 // pred_check
          %p221 = pneg %p104
        $region18: #{tpu_custom_call.1} parent=11 // pred_check_branch
          %223 = sbr.rel (%p221) target = $region20
        $region19: #{tpu_custom_call.1} parent=11 // pred_region
          %p224 = scmp.lt.s32.totalorder %s27, 0
          %s225 = scalar_select %p224, %s27, 0
          %s226 = smul.addr %s225, 4
          %s227 = scalar_lea.vmem %s2, %s226
        $region20: #{tpu_custom_call.1} parent=11 // pred_fallthru
          _
        // Predicated region
        $region21: #{tpu_custom_call.1} parent=11 // pred_check
          %p228 = pneg %p125
        $region22: #{tpu_custom_call.1} parent=11 // pred_check_branch
          %230 = sbr.rel (%p228) target = $region24
        $region23: #{tpu_custom_call.1} parent=11 // pred_region
          _
        $region24: #{tpu_custom_call.1} parent=11 // pred_fallthru
          _
        // Predicated region
        $region25: #{tpu_custom_call.1} parent=11 // pred_check
          %p231 = pneg %p146
        $region26: #{tpu_custom_call.1} parent=11 // pred_check_branch
          %233 = sbr.rel (%p231) target = $region28
        $region27: #{tpu_custom_call.1} parent=11 // pred_region
          _
        $region28: #{tpu_custom_call.1} parent=11 // pred_fallthru
          _
        // Predicated region
        $region29: #{tpu_custom_call.1} parent=11 // pred_check
          %p234 = pneg %p167
        $region30: #{tpu_custom_call.1} parent=11 // pred_check_branch
          %236 = sbr.rel (%p234) target = $region32
        $region31: #{tpu_custom_call.1} parent=11 // pred_region
          %s238 = ssub.s32 2048, 2048
          %239 = vsyncadd [#allocation7], %s238
          %s240 = sshll.u32 [#allocation6], 4
          %s241 = int_to_ptr.vmem [resolvable:$true] %s240
          %246 = dma.hbm_to_vmem [thread:$0]  %s5, 2048, %s241, [#allocation7], 128, 128, 8
        $region32: #{tpu_custom_call.1} parent=11 // pred_fallthru
          _
      $region12: #{tpu_custom_call.1} parent=5 // pred_fallthru
        _
      %p247 = scmp.lt.s32.totalorder %s17, 2
      // Predicated region
      $region33: #{tpu_custom_call.1} parent=5 // pred_check
        %p248 = pneg %p247
      $region34: #{tpu_custom_call.1} parent=5 // pred_check_branch
        %250 = sbr.rel (%p248) target = $region36
      $region35: #{tpu_custom_call.1} parent=5 // pred_region
        // Predicated region
        $region37: #{tpu_custom_call.1} parent=35 // pred_check
          %p251 = pneg %p51
        $region38: #{tpu_custom_call.1} parent=35 // pred_check_branch
          %253 = sbr.rel (%p251) target = $region40
        $region39: #{tpu_custom_call.1} parent=35 // pred_region
          %p254 = scmp.lt.s32.totalorder %s24, 1
          %s255 = scalar_select %p254, %s24, 1
          %p256 = scmp.lt.s32.totalorder %s25, 0
          %s257 = scalar_select %p256, %s25, 0
          %s258 = smul.addr %s257, 2
          %s259 = smul.addr %s255, 2
          %s260 = sadd.s32 %s258, %s259
          %s261 = smul.addr %s260, 2
          %s262 = scalar_lea.vmem %s0, %s261
        $region40: #{tpu_custom_call.1} parent=35 // pred_fallthru
          _
      $region36: #{tpu_custom_call.1} parent=5 // pred_fallthru
        _
      %p263 = scmp.le.s32.totalorder 1, %s17
      %p264 = scmp.lt.s32.totalorder %s17, 3
      %p265 = pnand %p263, %p264
      %p266 = pneg %p265
      // Predicated region
      $region41: #{tpu_custom_call.1} parent=5 // pred_check
        _
      $region42: #{tpu_custom_call.1} parent=5 // pred_check_branch
        %268 = sbr.rel (%p265) target = $region44
      $region43: #{tpu_custom_call.1} parent=5 // pred_region
        %s269 = ssub.s32 %s17, 1
        // Predicated region
        $region45: #{tpu_custom_call.1} parent=43 // pred_check
          %p270 = pneg %p78
        $region46: #{tpu_custom_call.1} parent=43 // pred_check_branch
          %272 = sbr.rel (%p270) target = $region48
        $region47: #{tpu_custom_call.1} parent=43 // pred_region
          %273 = dma.done [#allocation4], 2048
        $region48: #{tpu_custom_call.1} parent=43 // pred_fallthru
          _
        // Predicated region
        $region49: #{tpu_custom_call.1} parent=43 // pred_check
          %p274 = pneg %p167
        $region50: #{tpu_custom_call.1} parent=43 // pred_check_branch
          %276 = sbr.rel (%p274) target = $region52
        $region51: #{tpu_custom_call.1} parent=43 // pred_region
          %277 = dma.done [#allocation7], 2048
        $region52: #{tpu_custom_call.1} parent=43 // pred_fallthru
          _
        %p278 = scmp.lt.s32.totalorder %s26, 1
        %s279 = scalar_select %p278, %s26, 1
        %p280 = scmp.lt.s32.totalorder %s27, 0
        %s281 = scalar_select %p280, %s27, 0
        %s282 = smul.addr %s281, 2
        %s283 = smul.addr %s279, 2
        %s284 = sadd.s32 %s282, %s283
        %s285 = smul.addr %s284, 2
        %s286 = scalar_lea.vmem %s0, %s285
        %p287 = pneg %p57
        %p288 = pneg %p54
        %p289 = pneg %p78
        %p290 = pneg %p75
        %p291 = scmp.lt.s32.totalorder %s27, 0
        %s292 = scalar_select %p291, %s27, 0
        %s293 = smul.addr %s292, 4
        %s294 = scalar_lea.vmem %s2, %s293
        %p295 = pneg %p104
        %p296 = pneg %p101
        %p297 = pneg %p125
        %p298 = pneg %p122
        %p299 = pneg %p146
        %p300 = pneg %p143
        %p301 = pneg %p167
        %p302 = pneg %p164
        %p303 = pneg %p193
        %p304 = pneg %p190
        %s305 = sand.u32 %s180, 1
        %s306 = scalar_lea.sflag [#allocation5], %s305
        %s307 = sand.u32 %s180, 1
        %s308 = smul.addr %s307, 64
        %s309 = scalar_lea.vmem [#allocation8], %s308
        %p310 = scmp.lt.s32.totalorder %s26, 1
        %s311 = scalar_select %p310, %s26, 1
        %p312 = scmp.lt.s32.totalorder %s27, 0
        %s313 = scalar_select %p312, %s27, 0
        %s314 = smul.addr %s313, 2
        %s315 = smul.addr %s311, 2
        %s316 = sadd.s32 %s314, %s315
        %s317 = smul.addr %s316, 2
        %s318 = scalar_lea.vmem %s0, %s317
        %p319 = scmp.lt.s32.totalorder %s27, 0
        %s320 = scalar_select %p319, %s27, 0
        %s321 = smul.addr %s320, 4
        %s322 = scalar_lea.vmem %s2, %s321
        %p324 = scmp.eq.s32.totalorder %s27, 0
        // Predicated region
        $region53: #{tpu_custom_call.1} parent=43 // pred_check
          %p325 = pneg %p324
        $region54: #{tpu_custom_call.1} parent=43 // pred_check_branch
          %327 = sbr.rel (%p325) target = $region56
        $region55: #{tpu_custom_call.1} parent=43 // pred_region
          %328 = vst [vmem:[#allocation2] sm:$0xff] 0.0
          %329 = vst [vmem:[#allocation2 + $0x8] sm:$0xff] 0.0
          %330 = vst [vmem:[#allocation2 + $0x10] sm:$0xff] 0.0
          %331 = vst [vmem:[#allocation2 + $0x18] sm:$0xff] 0.0
        $region56: #{tpu_custom_call.1} parent=43 // pred_fallthru
          _
        %v332 = vld [vmem:[%s318] sm:$0xf]
        %v333 = vld [vmem:[#allocation3] sm:$0xf]
        %v334 = vld [vmem:[#allocation3 + $0x4] sm:$0xf]
        %v335 = vld [vmem:[#allocation3 + $0x8] sm:$0xf]
        %v336 = vld [vmem:[#allocation3 + $0xc] sm:$0xf]
        %v337 = vld [vmem:[#allocation3 + $0x10] sm:$0xf]
        %v338 = vld [vmem:[#allocation3 + $0x14] sm:$0xf]
        %v339 = vld [vmem:[#allocation3 + $0x18] sm:$0xf]
        %v340 = vld [vmem:[#allocation3 + $0x1c] sm:$0xf]
        %v341 = vld [vmem:[#allocation3 + $0x20] sm:$0xf]
        %v342 = vld [vmem:[#allocation3 + $0x24] sm:$0xf]
        %v343 = vld [vmem:[#allocation3 + $0x28] sm:$0xf]
        %v344 = vld [vmem:[#allocation3 + $0x2c] sm:$0xf]
        %v345 = vld [vmem:[#allocation3 + $0x30] sm:$0xf]
        %v346 = vld [vmem:[#allocation3 + $0x34] sm:$0xf]
        %v347 = vld [vmem:[#allocation3 + $0x38] sm:$0xf]
        %v348 = vld [vmem:[#allocation3 + $0x3c] sm:$0xf]
        %v349 = vld [vmem:[#allocation3 + $0x40] sm:$0xf]
        %v350 = vld [vmem:[#allocation3 + $0x44] sm:$0xf]
        %v351 = vld [vmem:[#allocation3 + $0x48] sm:$0xf]
        %v352 = vld [vmem:[#allocation3 + $0x4c] sm:$0xf]
        %v353 = vld [vmem:[#allocation3 + $0x50] sm:$0xf]
        %v354 = vld [vmem:[#allocation3 + $0x54] sm:$0xf]
        %v355 = vld [vmem:[#allocation3 + $0x58] sm:$0xf]
        %v356 = vld [vmem:[#allocation3 + $0x5c] sm:$0xf]
        %v357 = vld [vmem:[#allocation3 + $0x60] sm:$0xf]
        %v358 = vld [vmem:[#allocation3 + $0x64] sm:$0xf]
        %v359 = vld [vmem:[#allocation3 + $0x68] sm:$0xf]
        %v360 = vld [vmem:[#allocation3 + $0x6c] sm:$0xf]
        %v361 = vld [vmem:[#allocation3 + $0x70] sm:$0xf]
        %v362 = vld [vmem:[#allocation3 + $0x74] sm:$0xf]
        %v363 = vld [vmem:[#allocation3 + $0x78] sm:$0xf]
        %v364 = vld [vmem:[#allocation3 + $0x7c] sm:$0xf]
        %v367 = vunpack.c.l.s4 1983009808
        %v368 = vunpack.c.0.s8 %v367
        %v369 = vlaneseq
        %v370 = vshrl.u32 %v369, 7
        %v371 = vsub.s32 %v368, %v370
        %v372 = vrot.slane %v332, %v371
        %v373 = vcombine.high %v372, %v372
        %v408 = vunpack.c.l.b16 %v333
        %v409 = vunpack.c.l.b16 %v334
        %v410 = vunpack.c.l.b16 %v335
        %v411 = vunpack.c.l.b16 %v336
        %v412 = vunpack.c.l.b16 %v337
        %v413 = vunpack.c.l.b16 %v338
        %v414 = vunpack.c.l.b16 %v339
        %v415 = vunpack.c.l.b16 %v340
        %v416 = vunpack.c.l.b16 %v341
        %v417 = vunpack.c.l.b16 %v342
        %v418 = vunpack.c.l.b16 %v343
        %v419 = vunpack.c.l.b16 %v344
        %v420 = vunpack.c.l.b16 %v345
        %v421 = vunpack.c.l.b16 %v346
        %v422 = vunpack.c.l.b16 %v347
        %v423 = vunpack.c.l.b16 %v348
        %v424 = vunpack.c.l.b16 %v349
        %v425 = vunpack.c.l.b16 %v350
        %v426 = vunpack.c.l.b16 %v351
        %v427 = vunpack.c.l.b16 %v352
        %v428 = vunpack.c.l.b16 %v353
        %v429 = vunpack.c.l.b16 %v354
        %v430 = vunpack.c.l.b16 %v355
        %v431 = vunpack.c.l.b16 %v356
        %v432 = vunpack.c.l.b16 %v357
        %v433 = vunpack.c.l.b16 %v358
        %v434 = vunpack.c.l.b16 %v359
        %v435 = vunpack.c.l.b16 %v360
        %v436 = vunpack.c.l.b16 %v361
        %v437 = vunpack.c.l.b16 %v362
        %v438 = vunpack.c.l.b16 %v363
        %v439 = vunpack.c.l.b16 %v364
        %v440 = vpack.c.b16 %v409, %v408
        %v441 = vpack.c.b16 %v411, %v410
        %v442 = vpack.c.b16 %v413, %v412
        %v443 = vpack.c.b16 %v415, %v414
        %v444 = vpack.c.b16 %v417, %v416
        %v445 = vpack.c.b16 %v419, %v418
        %v446 = vpack.c.b16 %v421, %v420
        %v447 = vpack.c.b16 %v423, %v422
        %v448 = vpack.c.b16 %v425, %v424
        %v449 = vpack.c.b16 %v427, %v426
        %v450 = vpack.c.b16 %v429, %v428
        %v451 = vpack.c.b16 %v431, %v430
        %v452 = vpack.c.b16 %v433, %v432
        %v453 = vpack.c.b16 %v435, %v434
        %v454 = vpack.c.b16 %v437, %v436
        %v455 = vpack.c.b16 %v439, %v438
        %472 = vmatprep.subr.bf16.mxu0 0
        %473 = vmatpush1.bf16.msra.mxu0 %v440
        %474 = vmatprep.subr.bf16.mxu0 0
        %475 = vmatpush1.bf16.msra.mxu0 %v441
        %476 = vmatprep.subr.bf16.mxu0 0
        %477 = vmatpush1.bf16.msra.mxu0 %v442
        %478 = vmatprep.subr.bf16.mxu0 0
        %479 = vmatpush1.bf16.msra.mxu0 %v443
        %480 = vmatprep.subr.bf16.mxu0 0
        %481 = vmatpush1.bf16.msra.mxu0 %v444
        %482 = vmatprep.subr.bf16.mxu0 0
        %483 = vmatpush1.bf16.msra.mxu0 %v445
        %484 = vmatprep.subr.bf16.mxu0 0
        %485 = vmatpush1.bf16.msra.mxu0 %v446
        %486 = vmatprep.subr.bf16.mxu0 0
        %487 = vmatpush1.bf16.msra.mxu0 %v447
        %488 = vmatprep.subr.bf16.mxu0 0
        %489 = vmatpush1.bf16.msra.mxu0 %v448
        %490 = vmatprep.subr.bf16.mxu0 0
        %491 = vmatpush1.bf16.msra.mxu0 %v449
        %492 = vmatprep.subr.bf16.mxu0 0
        %493 = vmatpush1.bf16.msra.mxu0 %v450
        %494 = vmatprep.subr.bf16.mxu0 0
        %495 = vmatpush1.bf16.msra.mxu0 %v451
        %496 = vmatprep.subr.bf16.mxu0 0
        %497 = vmatpush1.bf16.msra.mxu0 %v452
        %498 = vmatprep.subr.bf16.mxu0 0
        %499 = vmatpush1.bf16.msra.mxu0 %v453
        %500 = vmatprep.subr.bf16.mxu0 0
        %501 = vmatpush1.bf16.msra.mxu0 %v454
        %502 = vmatprep.subr.bf16.mxu0 0
        %503 = vmatpush1.bf16.msra.mxu0 %v455
        %504 = vmatprep.mubr.bf16.mxu0 %v373
        %505 = vmatmul.mubr.bf16.gmra.mrb[0].mxu0 %v372
        %v506 = vpop.f32.mrb[0].mxu0
        %v507 = vadd.f32 0.0, %v506
        %v508 = vpop.f32.mrb[0].mxu0
        %v509 = vpop.f32.mrb[0].mxu0
        %v510 = vpop.f32.mrb[0].mxu0
        %511 = vdwg.mxu0
        %v512 = vld [vmem:[#allocation2] sm:$0xff]
        %v513 = vld [vmem:[#allocation2 + $0x8] sm:$0xff]
        %v514 = vld [vmem:[#allocation2 + $0x10] sm:$0xff]
        %v515 = vld [vmem:[#allocation2 + $0x18] sm:$0xff]
        %v516 = vld [vmem:[%s322] sm:$0xf]
        %v517 = vld [vmem:[%s322 + $0x4] sm:$0xf]
        %v518 = vld [vmem:[%s322 + $0x8] sm:$0xf]
        %v519 = vld [vmem:[%s322 + $0xc] sm:$0xf]
        %v520 = vpack.c.bf16 %v507, %v507
        %v525 = vunpack.c.l.b16 %v516
        %v526 = vunpack.c.l.b16 %v517
        %v527 = vunpack.c.l.b16 %v518
        %v528 = vunpack.c.l.b16 %v519
        %v529 = vpack.c.b16 %v526, %v525
        %v530 = vpack.c.b16 %v528, %v527
        %vm531 = vcmask 31744
        %v533 = vsel %vm531, %v529, 0
        %v536 = vsel %vm531, %v530, 0
        %vm538 = vcmask 1041408
        %v540 = vsel %vm538, %v520, 0
        %542 = vmatprep.subr.bf16.mxu0 0
        %543 = vmatpush1.bf16.msra.mxu0 %v540
        %544 = vmatprep.subr.bf16.mxu0 0
        %545 = vmatpush1.bf16.msra.mxu0 0
        %546 = vmatprep.subr.bf16.mxu0 0
        %547 = vmatpush1.bf16.msra.mxu0 0
        %548 = vmatprep.subr.bf16.mxu0 0
        %549 = vmatpush1.bf16.msra.mxu0 0
        %550 = vmatprep.subr.bf16.mxu0 0
        %551 = vmatpush1.bf16.msra.mxu0 0
        %552 = vmatprep.subr.bf16.mxu0 0
        %553 = vmatpush1.bf16.msra.mxu0 0
        %554 = vmatprep.subr.bf16.mxu0 0
        %555 = vmatpush1.bf16.msra.mxu0 0
        %556 = vmatprep.subr.bf16.mxu0 0
        %557 = vmatpush1.bf16.msra.mxu0 0
        %558 = vmatprep.subr.bf16.mxu0 0
        %559 = vmatpush1.bf16.msra.mxu0 0
        %560 = vmatprep.subr.bf16.mxu0 0
        %561 = vmatpush1.bf16.msra.mxu0 0
        %562 = vmatprep.subr.bf16.mxu0 0
        %563 = vmatpush1.bf16.msra.mxu0 0
        %564 = vmatprep.subr.bf16.mxu0 0
        %565 = vmatpush1.bf16.msra.mxu0 0
        %566 = vmatprep.subr.bf16.mxu0 0
        %567 = vmatpush1.bf16.msra.mxu0 0
        %568 = vmatprep.subr.bf16.mxu0 0
        %569 = vmatpush1.bf16.msra.mxu0 0
        %570 = vmatprep.subr.bf16.mxu0 0
        %571 = vmatpush1.bf16.msra.mxu0 0
        %572 = vmatprep.subr.bf16.mxu0 0
        %573 = vmatpush1.bf16.msra.mxu0 0
        %574 = vmatprep.mubr.bf16.mxu0 0
        %575 = vmatmul.mubr.bf16.gmra.mrb[0].mxu0 %v533
        %v576 = vpop.f32.mrb[0].mxu0
        %v577 = vadd.f32 0.0, %v576
        %v578 = vpop.f32.mrb[0].mxu0
        %v579 = vpop.f32.mrb[0].mxu0
        %v580 = vadd.f32 0.0, %v579
        %v581 = vpop.f32.mrb[0].mxu0
        %582 = vmatprep.mubr.bf16.mxu0 0
        %583 = vmatmul.mubr.bf16.gmra.mrb[0].mxu0 %v536
        %v584 = vpop.f32.mrb[0].mxu0
        %v585 = vadd.f32 0.0, %v584
        %v586 = vpop.f32.mrb[0].mxu0
        %v587 = vpop.f32.mrb[0].mxu0
        %v588 = vadd.f32 0.0, %v587
        %v589 = vpop.f32.mrb[0].mxu0
        %590 = vdwg.mxu0
        %v591 = vadd.f32 %v512, %v577
        %v592 = vadd.f32 %v513, %v580
        %v593 = vadd.f32 %v514, %v585
        %v594 = vadd.f32 %v515, %v588
        %595 = vst [vmem:[#allocation2] sm:$0xff] %v591
        %596 = vst [vmem:[#allocation2 + $0x8] sm:$0xff] %v592
        %597 = vst [vmem:[#allocation2 + $0x10] sm:$0xff] %v593
        %598 = vst [vmem:[#allocation2 + $0x18] sm:$0xff] %v594
        // Predicated region
        $region57: #{tpu_custom_call.1} parent=43 // pred_check
          %p599 = pneg %p324
        $region58: #{tpu_custom_call.1} parent=43 // pred_check_branch
          %601 = sbr.rel (%p599) target = $region60
        $region59: #{tpu_custom_call.1} parent=43 // pred_region
          %v602 = vld [vmem:[#allocation2] sm:$0xff]
          %v603 = vld [vmem:[#allocation2 + $0x8] sm:$0xff]
          %v604 = vld [vmem:[#allocation2 + $0x10] sm:$0xff]
          %v605 = vld [vmem:[#allocation2 + $0x18] sm:$0xff]
          %v606 = vld [vmem:[%s3] sm:$0xff]
          %v607 = vld [vmem:[%s3 + $0x8] sm:$0xff]
          %v608 = vld [vmem:[%s3 + $0x10] sm:$0xff]
          %v609 = vld [vmem:[%s3 + $0x18] sm:$0xff]
          %611 = vset.pattern.permute.xlu0 0
          %612 = vperm.xlu0 %611, %v606
          %v613 = vpop.permute.xlu0 %612
          %616 = vset.pattern.permute.xlu0 0
          %617 = vperm.xlu0 %616, %v607
          %v618 = vpop.permute.xlu0 %617
          %621 = vset.pattern.permute.xlu0 0
          %622 = vperm.xlu0 %621, %v608
          %v623 = vpop.permute.xlu0 %622
          %626 = vset.pattern.permute.xlu0 0
          %627 = vperm.xlu0 %626, %v609
          %v628 = vpop.permute.xlu0 %627
          %v630 = vadd.f32 %v602, %v613
          %v631 = vadd.f32 %v603, %v618
          %v632 = vadd.f32 %v604, %v623
          %v633 = vadd.f32 %v605, %v628
          %v634 = vmax.f32 %v630, 0.0
          %v635 = vmax.f32 %v631, 0.0
          %v636 = vmax.f32 %v632, 0.0
          %v637 = vmax.f32 %v633, 0.0
          %v638 = vld [vmem:[%s4] sm:$0xff]
          %v639 = vld [vmem:[%s4 + $0x8] sm:$0xff]
          %v640 = vld [vmem:[%s4 + $0x10] sm:$0xff]
          %v641 = vld [vmem:[%s4 + $0x18] sm:$0xff]
          %v642 = vmul.f32 %v634, %v638
          %v643 = vmul.f32 %v635, %v639
          %v644 = vmul.f32 %v636, %v640
          %v645 = vmul.f32 %v637, %v641
          %v646 = vpack.c.bf16 %v643, %v642
          %v647 = vpack.c.bf16 %v645, %v644
          %v648 = vld [vmem:[#allocation6] sm:$0xff]
          %v649 = vld [vmem:[#allocation6 + $0x8] sm:$0xff]
          %v650 = vld [vmem:[#allocation6 + $0x10] sm:$0xff]
          %v651 = vld [vmem:[#allocation6 + $0x18] sm:$0xff]
          %v652 = vld [vmem:[#allocation6 + $0x20] sm:$0xff]
          %v653 = vld [vmem:[#allocation6 + $0x28] sm:$0xff]
          %v654 = vld [vmem:[#allocation6 + $0x30] sm:$0xff]
          %v655 = vld [vmem:[#allocation6 + $0x38] sm:$0xff]
          %v656 = vld [vmem:[#allocation6 + $0x40] sm:$0xff]
          %v657 = vld [vmem:[#allocation6 + $0x48] sm:$0xff]
          %v658 = vld [vmem:[#allocation6 + $0x50] sm:$0xff]
          %v659 = vld [vmem:[#allocation6 + $0x58] sm:$0xff]
          %v660 = vld [vmem:[#allocation6 + $0x60] sm:$0xff]
          %v661 = vld [vmem:[#allocation6 + $0x68] sm:$0xff]
          %v662 = vld [vmem:[#allocation6 + $0x70] sm:$0xff]
          %v663 = vld [vmem:[#allocation6 + $0x78] sm:$0xff]
          %v680 = vunpack.c.l.b16 %v648
          %v681 = vunpack.c.h.b16 %v648
          %v682 = vunpack.c.l.b16 %v649
          %v683 = vunpack.c.h.b16 %v649
          %v684 = vunpack.c.l.b16 %v650
          %v685 = vunpack.c.h.b16 %v650
          %v686 = vunpack.c.l.b16 %v651
          %v687 = vunpack.c.h.b16 %v651
          %v688 = vunpack.c.l.b16 %v652
          %v689 = vunpack.c.h.b16 %v652
          %v690 = vunpack.c.l.b16 %v653
          %v691 = vunpack.c.h.b16 %v653
          %v692 = vunpack.c.l.b16 %v654
          %v693 = vunpack.c.h.b16 %v654
          %v694 = vunpack.c.l.b16 %v655
          %v695 = vunpack.c.h.b16 %v655
          %v696 = vunpack.c.l.b16 %v656
          %v697 = vunpack.c.h.b16 %v656
          %v698 = vunpack.c.l.b16 %v657
          %v699 = vunpack.c.h.b16 %v657
          %v700 = vunpack.c.l.b16 %v658
          %v701 = vunpack.c.h.b16 %v658
          %v702 = vunpack.c.l.b16 %v659
          %v703 = vunpack.c.h.b16 %v659
          %v704 = vunpack.c.l.b16 %v660
          %v705 = vunpack.c.h.b16 %v660
          %v706 = vunpack.c.l.b16 %v661
          %v707 = vunpack.c.h.b16 %v661
          %v708 = vunpack.c.l.b16 %v662
          %v709 = vunpack.c.h.b16 %v662
          %v710 = vunpack.c.l.b16 %v663
          %v711 = vunpack.c.h.b16 %v663
          %v712 = vpack.c.b16 %v682, %v680
          %v713 = vpack.c.b16 %v683, %v681
          %v714 = vpack.c.b16 %v686, %v684
          %v715 = vpack.c.b16 %v687, %v685
          %v716 = vpack.c.b16 %v690, %v688
          %v717 = vpack.c.b16 %v691, %v689
          %v718 = vpack.c.b16 %v694, %v692
          %v719 = vpack.c.b16 %v695, %v693
          %v720 = vpack.c.b16 %v698, %v696
          %v721 = vpack.c.b16 %v699, %v697
          %v722 = vpack.c.b16 %v702, %v700
          %v723 = vpack.c.b16 %v703, %v701
          %v724 = vpack.c.b16 %v706, %v704
          %v725 = vpack.c.b16 %v707, %v705
          %v726 = vpack.c.b16 %v710, %v708
          %v727 = vpack.c.b16 %v711, %v709
          %744 = vmatprep.subr.bf16.mxu0 %v713
          %745 = vmatpush1.bf16.msra.mxu0 %v712
          %746 = vmatprep.subr.bf16.mxu0 %v715
          %747 = vmatpush1.bf16.msra.mxu0 %v714
          %748 = vmatprep.subr.bf16.mxu0 %v717
          %749 = vmatpush1.bf16.msra.mxu0 %v716
          %750 = vmatprep.subr.bf16.mxu0 %v719
          %751 = vmatpush1.bf16.msra.mxu0 %v718
          %752 = vmatprep.subr.bf16.mxu0 %v721
          %753 = vmatpush1.bf16.msra.mxu0 %v720
          %754 = vmatprep.subr.bf16.mxu0 %v723
          %755 = vmatpush1.bf16.msra.mxu0 %v722
          %756 = vmatprep.subr.bf16.mxu0 %v725
          %757 = vmatpush1.bf16.msra.mxu0 %v724
          %758 = vmatprep.subr.bf16.mxu0 %v727
          %759 = vmatpush1.bf16.msra.mxu0 %v726
          %760 = vmatprep.subr.bf16.mxu0 0
          %761 = vmatpush1.bf16.msra.mxu0 0
          %762 = vmatprep.subr.bf16.mxu0 0
          %763 = vmatpush1.bf16.msra.mxu0 0
          %764 = vmatprep.subr.bf16.mxu0 0
          %765 = vmatpush1.bf16.msra.mxu0 0
          %766 = vmatprep.subr.bf16.mxu0 0
          %767 = vmatpush1.bf16.msra.mxu0 0
          %768 = vmatprep.subr.bf16.mxu0 0
          %769 = vmatpush1.bf16.msra.mxu0 0
          %770 = vmatprep.subr.bf16.mxu0 0
          %771 = vmatpush1.bf16.msra.mxu0 0
          %772 = vmatprep.subr.bf16.mxu0 0
          %773 = vmatpush1.bf16.msra.mxu0 0
          %774 = vmatprep.subr.bf16.mxu0 0
          %775 = vmatpush1.bf16.msra.mxu0 0
          %776 = vmatprep.mubr.bf16.mxu0 0
          %777 = vmatmul.mubr.bf16.gmra.mrb[0].mxu0 %v646
          %v778 = vpop.f32.mrb[0].mxu0
          %v779 = vadd.f32 0.0, %v778
          %v780 = vpop.f32.mrb[0].mxu0
          %v781 = vadd.f32 0.0, %v780
          %v782 = vpop.f32.mrb[0].mxu0
          %v783 = vadd.f32 0.0, %v782
          %v784 = vpop.f32.mrb[0].mxu0
          %v785 = vadd.f32 0.0, %v784
          %786 = vmatprep.mubr.bf16.mxu0 0
          %787 = vmatmul.mubr.bf16.gmra.mrb[0].mxu0 %v647
          %v788 = vpop.f32.mrb[0].mxu0
          %v789 = vadd.f32 0.0, %v788
          %v790 = vpop.f32.mrb[0].mxu0
          %v791 = vadd.f32 0.0, %v790
          %v792 = vpop.f32.mrb[0].mxu0
          %v793 = vadd.f32 0.0, %v792
          %v794 = vpop.f32.mrb[0].mxu0
          %v795 = vadd.f32 0.0, %v794
          %796 = vdwg.mxu0
          %797 = vst [vmem:[%s309] sm:$0xff] %v779
          %798 = vst [vmem:[%s309 + $0x8] sm:$0xff] %v781
          %799 = vst [vmem:[%s309 + $0x10] sm:$0xff] %v783
          %800 = vst [vmem:[%s309 + $0x18] sm:$0xff] %v785
          %801 = vst [vmem:[%s309 + $0x20] sm:$0xff] %v789
          %802 = vst [vmem:[%s309 + $0x28] sm:$0xff] %v791
          %803 = vst [vmem:[%s309 + $0x30] sm:$0xff] %v793
          %804 = vst [vmem:[%s309 + $0x38] sm:$0xff] %v795
        $region60: #{tpu_custom_call.1} parent=43 // pred_fallthru
          _
        %s805 = sand.u32 %s180, 1
        %s806 = scalar_lea.sflag [#allocation5], %s805
        %s807 = sand.u32 %s180, 1
        %s808 = smul.addr %s807, 64
        %s809 = scalar_lea.vmem [#allocation8], %s808
        // Predicated region
        $region61: #{tpu_custom_call.1} parent=43 // pred_check
          %p810 = pneg %p190
        $region62: #{tpu_custom_call.1} parent=43 // pred_check_branch
          %812 = sbr.rel (%p810) target = $region64
        $region63: #{tpu_custom_call.1} parent=43 // pred_region
          %s814 = ssub.s32 1024, 1024
          %815 = vsyncadd %s806, %s814
          %s816 = smul.addr %s26, 8
          %s817 = smul.addr %s816, 128
          %s818 = scalar_lea.hbm %s6, %s817
          %s819 = sshll.u32 %s809, 4
          %s820 = int_to_ptr.vmem [resolvable:$true] %s819
          %825 = dma.vmem_to_hbm [thread:$0]  %s820, 1024, %s818, %s806, 256, 256, 16
        $region64: #{tpu_custom_call.1} parent=43 // pred_fallthru
          _
      $region44: #{tpu_custom_call.1} parent=5 // pred_fallthru
        _
      %p826 = scmp.le.s32.totalorder 2, %s17
      // Predicated region
      $region65: #{tpu_custom_call.1} parent=5 // pred_check
        %p827 = pneg %p826
      $region66: #{tpu_custom_call.1} parent=5 // pred_check_branch
        %829 = sbr.rel (%p827) target = $region68
      $region67: #{tpu_custom_call.1} parent=5 // pred_region
        %s830 = ssub.s32 %s17, 2
        // Predicated region
        $region69: #{tpu_custom_call.1} parent=67 // pred_check
          %p831 = pneg %p196
        $region70: #{tpu_custom_call.1} parent=67 // pred_check_branch
          %833 = sbr.rel (%p831) target = $region72
        $region71: #{tpu_custom_call.1} parent=67 // pred_region
          %s834 = sand.u32 %s181, 1
          %s835 = scalar_lea.sflag [#allocation5], %s834
          %s836 = sand.u32 %s181, 1
          %s837 = smul.addr %s836, 64
          %s838 = scalar_lea.vmem [#allocation8], %s837
          %839 = dma.done %s835, 1024
        $region72: #{tpu_custom_call.1} parent=67 // pred_fallthru
          _
      $region68: #{tpu_custom_call.1} parent=5 // pred_fallthru
        _
    $region6: #{tpu_custom_call.1} parent=1 // loop_footer
      %s21 = sadd.s32 1, %s17
    $region7: #{tpu_custom_call.1} parent=1 // loop_footer_branch
      %16 = sbr.rel target = $region3
    $region8: #{tpu_custom_call.1} parent=1 // loop_exit
      _
    %840 = vsyncpa [#allocation4], 1
    %s841 = scalar_lea.sflag [#allocation4], 1
    %842 = vsyncpa %s841, 1
    %843 = vsyncpa [#allocation7], 1
    %844 = vsyncpa [#allocation5], 1
    %s845 = scalar_lea.sflag [#allocation5], 1
    %846 = vsyncpa %s845, 1

</llo_original>
